<compile_context>
chip_gen: v7x
topology: tpu7x:2x2x1
jax: 0.10.0
libtpu: 0.0.40
codegen_flags: <defaults>
</compile_context>

<pallas_src>
import functools

import jax
import jax.numpy as jnp
from jax.experimental import pallas as pl
from jax.experimental.pallas import tpu as pltpu


def _round_up(n, m):
    return ((n + m - 1) // m) * m


def _cdiv(a, b):
    return -(-a // b)


def _pick_act_dtype():
    """bf16 tanh on v6e/v7x (bf16 VPU/EUP); f32 on v5e and older (no bf16 VPU/EUP)."""
    try:
        kind = jax.devices()[0].device_kind.lower()
    except Exception:
        return jnp.float32
    return jnp.bfloat16 if ("v6" in kind or "v7" in kind) else jnp.float32


_ACT_DTYPE = _pick_act_dtype()

# Max rows per grid step.  Even at 4096 rows the per-step footprint
# (x: 4096*32*4B = 512 KiB, fused out: 4096*8*4B = 128 KiB, all weights < 10 KiB)
# is ~1.3 MiB double-buffered -- far below VMEM on v5e/v6e/v7x.
_TB_MAX = 2048


def _mlp_kernel(x_ref,
                w1_ref, b1_ref,
                w2_ref, b2_ref,
                w3_ref, b3_ref,
                w4_ref, b4_ref,
                out_ref, *, act_dtype):
    """fc1->tanh->fc2->tanh->fc3->tanh->fc4 (+sigmoid) for one batch tile.

    Matmul operands: bf16 (fast MXU path).  Accumulation + bias: f32.
    tanh runs in `act_dtype` (bf16 on v6e/v7x, f32 on v5e).
    Logits and sigmoid(logits) are written as one lane-concatenated tile.
    """
    bf16 = jnp.bfloat16

    def layer(h, w_ref, b_ref):
        z = jnp.dot(h, w_ref[...], preferred_element_type=jnp.float32) + b_ref[...]
        return jnp.tanh(z.astype(act_dtype)).astype(bf16)

    h = x_ref[...].astype(bf16)
    h = layer(h, w1_ref, b1_ref)
    h = layer(h, w2_ref, b2_ref)
    h = layer(h, w3_ref, b3_ref)
    logits = (jnp.dot(h, w4_ref[...], preferred_element_type=jnp.float32)
              + b4_ref[...])
    probs = jax.nn.sigmoid(logits)                 # single EUP lax.logistic op
    out_ref[...] = jnp.concatenate([logits, probs], axis=-1)


@jax.jit
def neural_net_forward(x, params):
    """Mirrors NeuralNet.forward; returns (logits, probs) from one pallas_call.

    params = (w1, b1, w2, b2, w3, b3, w4, b4): w_i stored (in, out) in bf16,
    b_i stored (1, out) in f32.
    """
    w1, b1, w2, b2, w3, b3, w4, b4 = params
    batch, input_size = x.shape
    num_classes = w4.shape[1]

    # Tiling: fewest tiles that fit under _TB_MAX; pad rows only to a multiple of 8.
    n_tiles = _cdiv(batch, _TB_MAX)
    if batch >= 512 and n_tiles % 2:
        n_tiles += 1            # even grid -> both v7x TensorCores get work
    tb = _round_up(_cdiv(batch, n_tiles), 8)
    padded = n_tiles * tb
    if padded != batch:
        x = jnp.pad(x, ((0, padded - batch), (0, 0)))

    def resident(a):            # constant block index -> stays VMEM-resident
        return pl.BlockSpec(a.shape, lambda i: (0, 0))

    fused = pl.pallas_call(
        functools.partial(_mlp_kernel, act_dtype=_ACT_DTYPE),
        out_shape=jax.ShapeDtypeStruct((padded, 2 * num_classes), jnp.float32),
        grid=(n_tiles,),
        in_specs=[
            pl.BlockSpec((tb, input_size), lambda i: (i, 0)),
            resident(w1), resident(b1),
            resident(w2), resident(b2),
            resident(w3), resident(b3),
            resident(w4), resident(b4),
        ],
        out_specs=pl.BlockSpec((tb, 2 * num_classes), lambda i: (i, 0)),
        compiler_params=pltpu.CompilerParams(
            dimension_semantics=("parallel",),     # megacore / v7x 2-TC batch split
        ),
    )(x, w1, b1, w2, b2, w3, b3, w4, b4)

    logits = fused[:batch, :num_classes]
    probs = fused[:batch, num_classes:]
    return logits, probs


def init_params(key, input_size, hidden_size, num_classes):
    """PyTorch nn.Linear-style init (uniform +-1/sqrt(fan_in)).
    Weights stored transposed (in, out) in bf16; biases (1, out) in f32."""
    dims = [(input_size, hidden_size),
            (hidden_size, hidden_size),
            (hidden_size, hidden_size),
            (hidden_size, num_classes)]
    params = []
    for fan_in, fan_out in dims:
        key, kw, kb = jax.random.split(key, 3)
        bound = 1.0 / jnp.sqrt(fan_in)
        w = jax.random.uniform(kw, (fan_in, fan_out), jnp.float32, -bound, bound)
        b = jax.random.uniform(kb, (1, fan_out), jnp.float32, -bound, bound)
        params += [w.astype(jnp.bfloat16), b]
    return tuple(params)


def _reference_forward(x, params, act_dtype):
    """Pure-JAX reference mirroring the kernel's precision recipe."""
    w1, b1, w2, b2, w3, b3, w4, b4 = params
    bf16 = jnp.bfloat16

    def layer(h, w, b):
        z = jnp.dot(h, w, preferred_element_type=jnp.float32) + b
        return jnp.tanh(z.astype(act_dtype)).astype(bf16)

    h = x.astype(bf16)
    h = layer(h, w1, b1)
    h = layer(h, w2, b2)
    h = layer(h, w3, b3)
    logits = jnp.dot(h, w4, preferred_element_type=jnp.float32) + b4
    return logits, jax.nn.sigmoid(logits)


if __name__ == "__main__":
    input_size = 32
    hidden_size = 32
    num_classes = 4

    key = jax.random.PRNGKey(0)
    key, kp = jax.random.split(key)
    params = init_params(kp, input_size, hidden_size, num_classes)

    # Small case (single tile) and a mid case exercising the even-grid /
    # minimal-padding path (batch=640 -> 2 tiles of 320 rows, zero padded rows).
    for batch in (8, 640):
        key, kx = jax.random.split(key)
        x = jax.random.normal(kx, (batch, input_size), jnp.float32)

        logits, probs = neural_net_forward(x, params)
        jax.block_until_ready((logits, probs))

        assert logits.shape == (batch, num_classes)
        assert probs.shape == (batch, num_classes)

        # probs must be sigmoid(logits) (both produced inside the kernel).
        sig = 1.0 / (1.0 + jnp.exp(-logits))
        assert jnp.allclose(probs, sig, atol=1e-5), "sigmoid mismatch"

        # Cross-check against a pure-JAX reference with the same precision recipe.
        ref_logits, ref_probs = _reference_forward(x, params, _ACT_DTYPE)
        assert jnp.allclose(logits, ref_logits, atol=2e-2), "logits mismatch vs reference"
        assert jnp.allclose(probs, ref_probs, atol=2e-2), "probs mismatch vs reference"

    print("KERNEL_OK")
</pallas_src>

<mosaic_0001>
module attributes {stable_mosaic.version = 11 : i64} {
  func.func @_mlp_kernel(%arg0: i32, %arg1: memref<8x32xf32, #tpu.memory_space<vmem>>, %arg2: memref<32x32xbf16, #tpu.memory_space<vmem>>, %arg3: memref<1x32xf32, #tpu.memory_space<vmem>>, %arg4: memref<32x32xbf16, #tpu.memory_space<vmem>>, %arg5: memref<1x32xf32, #tpu.memory_space<vmem>>, %arg6: memref<32x32xbf16, #tpu.memory_space<vmem>>, %arg7: memref<1x32xf32, #tpu.memory_space<vmem>>, %arg8: memref<32x4xbf16, #tpu.memory_space<vmem>>, %arg9: memref<1x4xf32, #tpu.memory_space<vmem>>, %arg10: memref<8x8xf32, #tpu.memory_space<vmem>>) attributes {dimension_semantics = [#tpu.dimension_semantics<parallel>], iteration_bounds = array<i64: 1>, scalar_prefetch = 0 : i64, scratch_operands = 0 : i64, tpu.core_type = #tpu.core_type<tc>, window_params = [{transform_indices = @transform_0, window_bounds = array<i64: 8, 32>}, {pipeline_mode = #tpu.pipeline_mode<synchronous>, transform_indices = @transform_1, window_bounds = array<i64: 32, 32>}, {pipeline_mode = #tpu.pipeline_mode<synchronous>, transform_indices = @transform_2, window_bounds = array<i64: 1, 32>}, {pipeline_mode = #tpu.pipeline_mode<synchronous>, transform_indices = @transform_3, window_bounds = array<i64: 32, 32>}, {pipeline_mode = #tpu.pipeline_mode<synchronous>, transform_indices = @transform_4, window_bounds = array<i64: 1, 32>}, {pipeline_mode = #tpu.pipeline_mode<synchronous>, transform_indices = @transform_5, window_bounds = array<i64: 32, 32>}, {pipeline_mode = #tpu.pipeline_mode<synchronous>, transform_indices = @transform_6, window_bounds = array<i64: 1, 32>}, {pipeline_mode = #tpu.pipeline_mode<synchronous>, transform_indices = @transform_7, window_bounds = array<i64: 32, 4>}, {pipeline_mode = #tpu.pipeline_mode<synchronous>, transform_indices = @transform_8, window_bounds = array<i64: 1, 4>}, {transform_indices = @transform_9, window_bounds = array<i64: 8, 8>}]} {
    %c0 = arith.constant 0 : index
    %c0_0 = arith.constant 0 : index
    %0 = vector.load %arg1[%c0, %c0_0] : memref<8x32xf32, #tpu.memory_space<vmem>>, vector<8x32xf32>
    %1 = arith.truncf %0 : vector<8x32xf32> to vector<8x32xbf16>
    %c0_1 = arith.constant 0 : index
    %c0_2 = arith.constant 0 : index
    %2 = vector.load %arg2[%c0_1, %c0_2] : memref<32x32xbf16, #tpu.memory_space<vmem>>, vector<32x32xbf16>
    %cst = arith.constant dense<0.000000e+00> : vector<8x32xf32>
    %3 = tpu.matmul %1, %2, %cst {dimension_numbers = #tpu.dot_dimension_numbers<[1], [0], [0], [1], [0, 0, 1, 1], [], []>} : vector<8x32xbf16>, vector<32x32xbf16>, vector<8x32xf32> -> vector<8x32xf32>
    %c0_3 = arith.constant 0 : index
    %c0_4 = arith.constant 0 : index
    %4 = vector.load %arg3[%c0_3, %c0_4] : memref<1x32xf32, #tpu.memory_space<vmem>>, vector<1x32xf32>
    %5 = vector.broadcast %4 : vector<1x32xf32> to vector<8x32xf32>
    %6 = arith.addf %3, %5 : vector<8x32xf32>
    %7 = math.tanh %6 : vector<8x32xf32>
    %8 = arith.truncf %7 : vector<8x32xf32> to vector<8x32xbf16>
    %c0_5 = arith.constant 0 : index
    %c0_6 = arith.constant 0 : index
    %9 = vector.load %arg4[%c0_5, %c0_6] : memref<32x32xbf16, #tpu.memory_space<vmem>>, vector<32x32xbf16>
    %cst_7 = arith.constant dense<0.000000e+00> : vector<8x32xf32>
    %10 = tpu.matmul %8, %9, %cst_7 {dimension_numbers = #tpu.dot_dimension_numbers<[1], [0], [0], [1], [0, 0, 1, 1], [], []>} : vector<8x32xbf16>, vector<32x32xbf16>, vector<8x32xf32> -> vector<8x32xf32>
    %c0_8 = arith.constant 0 : index
    %c0_9 = arith.constant 0 : index
    %11 = vector.load %arg5[%c0_8, %c0_9] : memref<1x32xf32, #tpu.memory_space<vmem>>, vector<1x32xf32>
    %12 = vector.broadcast %11 : vector<1x32xf32> to vector<8x32xf32>
    %13 = arith.addf %10, %12 : vector<8x32xf32>
    %14 = math.tanh %13 : vector<8x32xf32>
    %15 = arith.truncf %14 : vector<8x32xf32> to vector<8x32xbf16>
    %c0_10 = arith.constant 0 : index
    %c0_11 = arith.constant 0 : index
    %16 = vector.load %arg6[%c0_10, %c0_11] : memref<32x32xbf16, #tpu.memory_space<vmem>>, vector<32x32xbf16>
    %cst_12 = arith.constant dense<0.000000e+00> : vector<8x32xf32>
    %17 = tpu.matmul %15, %16, %cst_12 {dimension_numbers = #tpu.dot_dimension_numbers<[1], [0], [0], [1], [0, 0, 1, 1], [], []>} : vector<8x32xbf16>, vector<32x32xbf16>, vector<8x32xf32> -> vector<8x32xf32>
    %c0_13 = arith.constant 0 : index
    %c0_14 = arith.constant 0 : index
    %18 = vector.load %arg7[%c0_13, %c0_14] : memref<1x32xf32, #tpu.memory_space<vmem>>, vector<1x32xf32>
    %19 = vector.broadcast %18 : vector<1x32xf32> to vector<8x32xf32>
    %20 = arith.addf %17, %19 : vector<8x32xf32>
    %21 = math.tanh %20 : vector<8x32xf32>
    %22 = arith.truncf %21 : vector<8x32xf32> to vector<8x32xbf16>
    %c0_15 = arith.constant 0 : index
    %c0_16 = arith.constant 0 : index
    %23 = vector.load %arg8[%c0_15, %c0_16] : memref<32x4xbf16, #tpu.memory_space<vmem>>, vector<32x4xbf16>
    %cst_17 = arith.constant dense<0.000000e+00> : vector<8x4xf32>
    %24 = tpu.matmul %22, %23, %cst_17 {dimension_numbers = #tpu.dot_dimension_numbers<[1], [0], [0], [1], [0, 0, 1, 1], [], []>} : vector<8x32xbf16>, vector<32x4xbf16>, vector<8x4xf32> -> vector<8x4xf32>
    %c0_18 = arith.constant 0 : index
    %c0_19 = arith.constant 0 : index
    %25 = vector.load %arg9[%c0_18, %c0_19] : memref<1x4xf32, #tpu.memory_space<vmem>>, vector<1x4xf32>
    %26 = vector.broadcast %25 : vector<1x4xf32> to vector<8x4xf32>
    %27 = arith.addf %24, %26 : vector<8x4xf32>
    %28 = arith.negf %27 : vector<8x4xf32>
    %29 = math.exp %28 : vector<8x4xf32>
    %cst_20 = arith.constant 1.000000e+00 : f32
    %30 = vector.broadcast %cst_20 : f32 to vector<8x4xf32>
    %31 = arith.addf %30, %29 : vector<8x4xf32>
    %32 = arith.divf %30, %31 : vector<8x4xf32>
    %33 = tpu.concatenate %27, %32 in 1 : vector<8x4xf32>, vector<8x4xf32> -> vector<8x8xf32>
    %c0_21 = arith.constant 0 : index
    %c0_22 = arith.constant 0 : index
    %34 = vector.load %arg10[%c0_21, %c0_22] : memref<8x8xf32, #tpu.memory_space<vmem>>, vector<8x8xf32>
    tpu.vector_store %arg10[%c0_21, %c0_22], %33 {strides = array<i32>} : memref<8x8xf32, #tpu.memory_space<vmem>>, vector<8x8xf32>,
    return
  }
  func.func @transform_0(%arg0: i32) -> (i32, i32) {
    %c0_i32 = arith.constant 0 : i32
    %c0_i32_0 = arith.constant 0 : i32
    return %arg0, %c0_i32 : i32, i32
  }
  func.func @transform_1(%arg0: i32) -> (i32, i32) {
    %c0_i32 = arith.constant 0 : i32
    %c0_i32_0 = arith.constant 0 : i32
    %c0_i32_1 = arith.constant 0 : i32
    return %c0_i32, %c0_i32_0 : i32, i32
  }
  func.func @transform_2(%arg0: i32) -> (i32, i32) {
    %c0_i32 = arith.constant 0 : i32
    %c0_i32_0 = arith.constant 0 : i32
    %c0_i32_1 = arith.constant 0 : i32
    return %c0_i32, %c0_i32_0 : i32, i32
  }
  func.func @transform_3(%arg0: i32) -> (i32, i32) {
    %c0_i32 = arith.constant 0 : i32
    %c0_i32_0 = arith.constant 0 : i32
    %c0_i32_1 = arith.constant 0 : i32
    return %c0_i32, %c0_i32_0 : i32, i32
  }
  func.func @transform_4(%arg0: i32) -> (i32, i32) {
    %c0_i32 = arith.constant 0 : i32
    %c0_i32_0 = arith.constant 0 : i32
    %c0_i32_1 = arith.constant 0 : i32
    return %c0_i32, %c0_i32_0 : i32, i32
  }
  func.func @transform_5(%arg0: i32) -> (i32, i32) {
    %c0_i32 = arith.constant 0 : i32
    %c0_i32_0 = arith.constant 0 : i32
    %c0_i32_1 = arith.constant 0 : i32
    return %c0_i32, %c0_i32_0 : i32, i32
  }
  func.func @transform_6(%arg0: i32) -> (i32, i32) {
    %c0_i32 = arith.constant 0 : i32
    %c0_i32_0 = arith.constant 0 : i32
    %c0_i32_1 = arith.constant 0 : i32
    return %c0_i32, %c0_i32_0 : i32, i32
  }
  func.func @transform_7(%arg0: i32) -> (i32, i32) {
    %c0_i32 = arith.constant 0 : i32
    %c0_i32_0 = arith.constant 0 : i32
    %c0_i32_1 = arith.constant 0 : i32
    return %c0_i32, %c0_i32_0 : i32, i32
  }
  func.func @transform_8(%arg0: i32) -> (i32, i32) {
    %c0_i32 = arith.constant 0 : i32
    %c0_i32_0 = arith.constant 0 : i32
    %c0_i32_1 = arith.constant 0 : i32
    return %c0_i32, %c0_i32_0 : i32, i32
  }
  func.func @transform_9(%arg0: i32) -> (i32, i32) {
    %c0_i32 = arith.constant 0 : i32
    %c0_i32_0 = arith.constant 0 : i32
    return %arg0, %c0_i32 : i32, i32
  }
}

</mosaic_0001>

<llo_original>
// kernel: neural_net_forward.1
$region0: #{neural_net_forward.1}
  #allocation0 [shape = 'u32[]', space=smem, size = 0x4, offset = 0x4, fixed_abs, tag = 'smem constant byte address 0x4 - core index']
  #allocation1 [shape = 'u32[144,128]{1,0:T(1,128)}', space=vmem, size = 0x12000, scoped, tag = 'internal scratch']
  %s0 = inlined_call_operand.hbm [shape: f32[8,32], index: 0, kind: input, shape index: {}]
  %s1 = inlined_call_operand.vmem [shape: bf16[32,32], index: 1, kind: input, shape index: {}]
  %s2 = inlined_call_operand.vmem [shape: f32[1,32], index: 2, kind: input, shape index: {}]
  %s3 = inlined_call_operand.hbm [shape: bf16[32,32], index: 3, kind: input, shape index: {}]
  %s4 = inlined_call_operand.hbm [shape: f32[1,32], index: 4, kind: input, shape index: {}]
  %s5 = inlined_call_operand.vmem [shape: bf16[32,32], index: 5, kind: input, shape index: {}]
  %s6 = inlined_call_operand.vmem [shape: f32[1,32], index: 6, kind: input, shape index: {}]
  %s7 = inlined_call_operand.vmem [shape: bf16[32,4], index: 7, kind: input, shape index: {}]
  %s8 = inlined_call_operand.vmem [shape: f32[1,4], index: 8, kind: input, shape index: {}]
  %s9 = inlined_call_operand.vmem [shape: f32[8,8], index: 9, kind: output, shape index: {}]
  %s10 = sld [smem:[#allocation0]]
  $region58: #{neural_net_forward.1} parent=0
    _
  %s12 = ssub.s32 1, %s10
  %s13 = scalar_select 0, %s12, %s10
  $region1: #{neural_net_forward.1} parent=0
    #allocation2 [shape = 'u8[4096]{0}', space=vmem, size = 0x1000, scoped, tag = 'input window, operand 0, single buffered']
    #allocation3 [shape = 's32[1]{0}', space=sflag, size = 0x4, scoped, tag = 'scoped memory for neural_net_forward.1']
    #allocation4 [shape = 'u8[8192]{0}', space=vmem, size = 0x2000, scoped, tag = 'input window, operand 3, single buffered']
    #allocation5 [shape = 's32[1]{0}', space=sflag, size = 0x4, scoped, tag = 'scoped memory for neural_net_forward.1']
    #allocation6 [shape = 'u8[512]{0}', space=vmem, size = 0x400, scoped, tag = 'input window, operand 4, single buffered']
    %14 = vsyncpa [#allocation3], 0
    %15 = vsyncpa [#allocation5], 0
    // Predicated region
    $region2: #{neural_net_forward.1} parent=1 // pred_check
      _
    $region3: #{neural_net_forward.1} parent=1 // pred_check_branch
      %17 = sbr.rel (0) target = $region5
    $region4: #{neural_net_forward.1} parent=1 // pred_region
      %s19 = ssub.s32 128, 128
      %20 = vsyncadd [#allocation3], %s19
      %s22 = sshll.u32 [#allocation2], 4
      %s23 = int_to_ptr.vmem [resolvable:$true] %s22
      %25 = dma.hbm_to_vmem [thread:$0]  %s0, 128, %s23, [#allocation3]
    $region5: #{neural_net_forward.1} parent=1 // pred_fallthru
      _
    // Predicated region
    $region6: #{neural_net_forward.1} parent=1 // pred_check
      _
    $region7: #{neural_net_forward.1} parent=1 // pred_check_branch
      %27 = sbr.rel (0) target = $region9
    $region8: #{neural_net_forward.1} parent=1 // pred_region
      _
    $region9: #{neural_net_forward.1} parent=1 // pred_fallthru
      _
    // Predicated region
    $region10: #{neural_net_forward.1} parent=1 // pred_check
      _
    $region11: #{neural_net_forward.1} parent=1 // pred_check_branch
      %29 = sbr.rel (0) target = $region13
    $region12: #{neural_net_forward.1} parent=1 // pred_region
      _
    $region13: #{neural_net_forward.1} parent=1 // pred_fallthru
      _
    // Predicated region
    $region14: #{neural_net_forward.1} parent=1 // pred_check
      _
    $region15: #{neural_net_forward.1} parent=1 // pred_check_branch
      %31 = sbr.rel (0) target = $region17
    $region16: #{neural_net_forward.1} parent=1 // pred_region
      %s33 = ssub.s32 256, 256
      %34 = vsyncadd [#allocation5], %s33
      %s35 = sshll.u32 [#allocation4], 4
      %s36 = int_to_ptr.vmem [resolvable:$true] %s35
      %41 = dma.hbm_to_vmem [thread:$0]  %s3, 256, %s36, [#allocation5], 64, 64, 4
    $region17: #{neural_net_forward.1} parent=1 // pred_fallthru
      _
    // Predicated region
    $region18: #{neural_net_forward.1} parent=1 // pred_check
      _
    $region19: #{neural_net_forward.1} parent=1 // pred_check_branch
      %43 = sbr.rel (0) target = $region21
    $region20: #{neural_net_forward.1} parent=1 // pred_region
      %s45 = ssub.s32 16, 16
      %46 = vsyncadd [#allocation5], %s45
      %s48 = sshll.u32 [#allocation6], 4
      %s49 = int_to_ptr.vmem [resolvable:$true] %s48
      %51 = dma.hbm_to_vmem [thread:$0]  %s4, 16, %s49, [#allocation5]
    $region21: #{neural_net_forward.1} parent=1 // pred_fallthru
      _
    // Predicated region
    $region22: #{neural_net_forward.1} parent=1 // pred_check
      _
    $region23: #{neural_net_forward.1} parent=1 // pred_check_branch
      %53 = sbr.rel (0) target = $region25
    $region24: #{neural_net_forward.1} parent=1 // pred_region
      _
    $region25: #{neural_net_forward.1} parent=1 // pred_fallthru
      _
    // Predicated region
    $region26: #{neural_net_forward.1} parent=1 // pred_check
      _
    $region27: #{neural_net_forward.1} parent=1 // pred_check_branch
      %55 = sbr.rel (0) target = $region29
    $region28: #{neural_net_forward.1} parent=1 // pred_region
      _
    $region29: #{neural_net_forward.1} parent=1 // pred_fallthru
      _
    // Predicated region
    $region30: #{neural_net_forward.1} parent=1 // pred_check
      _
    $region31: #{neural_net_forward.1} parent=1 // pred_check_branch
      %57 = sbr.rel (0) target = $region33
    $region32: #{neural_net_forward.1} parent=1 // pred_region
      _
    $region33: #{neural_net_forward.1} parent=1 // pred_fallthru
      _
    // Predicated region
    $region34: #{neural_net_forward.1} parent=1 // pred_check
      _
    $region35: #{neural_net_forward.1} parent=1 // pred_check_branch
      %59 = sbr.rel (0) target = $region37
    $region36: #{neural_net_forward.1} parent=1 // pred_region
      _
    $region37: #{neural_net_forward.1} parent=1 // pred_fallthru
      _
    // Predicated region
    $region38: #{neural_net_forward.1} parent=1 // pred_check
      _
    $region39: #{neural_net_forward.1} parent=1 // pred_check_branch
      %61 = sbr.rel (0) target = $region41
    $region40: #{neural_net_forward.1} parent=1 // pred_region
      %62 = dma.done [#allocation3], 128
    $region41: #{neural_net_forward.1} parent=1 // pred_fallthru
      _
    // Predicated region
    $region42: #{neural_net_forward.1} parent=1 // pred_check
      _
    $region43: #{neural_net_forward.1} parent=1 // pred_check_branch
      %64 = sbr.rel (0) target = $region45
    $region44: #{neural_net_forward.1} parent=1 // pred_region
      %65 = dma.done [#allocation5], 256
    $region45: #{neural_net_forward.1} parent=1 // pred_fallthru
      _
    // Predicated region
    $region46: #{neural_net_forward.1} parent=1 // pred_check
      _
    $region47: #{neural_net_forward.1} parent=1 // pred_check_branch
      %67 = sbr.rel (0) target = $region49
    $region48: #{neural_net_forward.1} parent=1 // pred_region
      %68 = dma.done [#allocation5], 16
    $region49: #{neural_net_forward.1} parent=1 // pred_fallthru
      _
    %v70 = vld [vmem:[#allocation2] sm:$0xff]
    %v71 = vpack.c.bf16 %v70, %v70
    %v72 = vld [vmem:[%s1] sm:$0xf]
    %v73 = vld [vmem:[%s1 + $0x4] sm:$0xf]
    %v74 = vld [vmem:[%s1 + $0x8] sm:$0xf]
    %v75 = vld [vmem:[%s1 + $0xc] sm:$0xf]
    %v76 = vld [vmem:[%s2] sm:$0x1]
    %v78 = vlaneseq
    %v79 = vshrl.u32 %v78, 7
    %v80 = vsub.s32 0, %v79
    %v81 = vrot.slane %v76, %v80
    %v87 = vunpack.c.l.b16 %v72
    %v88 = vunpack.c.l.b16 %v73
    %v89 = vunpack.c.l.b16 %v74
    %v90 = vunpack.c.l.b16 %v75
    %v91 = vpack.c.b16 %v88, %v87
    %v92 = vpack.c.b16 %v90, %v89
    %vm95 = vcmask 261120
    %v97 = vsel %vm95, %v71, 0
    %99 = vmatprep.subr.bf16.mxu0 0
    %100 = vmatpush1.bf16.msra.mxu0 %v91
    %101 = vmatprep.subr.bf16.mxu0 0
    %102 = vmatpush1.bf16.msra.mxu0 %v92
    %103 = vmatprep.subr.bf16.mxu0 0
    %104 = vmatpush1.bf16.msra.mxu0 0
    %105 = vmatprep.subr.bf16.mxu0 0
    %106 = vmatpush1.bf16.msra.mxu0 0
    %107 = vmatprep.subr.bf16.mxu0 0
    %108 = vmatpush1.bf16.msra.mxu0 0
    %109 = vmatprep.subr.bf16.mxu0 0
    %110 = vmatpush1.bf16.msra.mxu0 0
    %111 = vmatprep.subr.bf16.mxu0 0
    %112 = vmatpush1.bf16.msra.mxu0 0
    %113 = vmatprep.subr.bf16.mxu0 0
    %114 = vmatpush1.bf16.msra.mxu0 0
    %115 = vmatprep.subr.bf16.mxu0 0
    %116 = vmatpush1.bf16.msra.mxu0 0
    %117 = vmatprep.subr.bf16.mxu0 0
    %118 = vmatpush1.bf16.msra.mxu0 0
    %119 = vmatprep.subr.bf16.mxu0 0
    %120 = vmatpush1.bf16.msra.mxu0 0
    %121 = vmatprep.subr.bf16.mxu0 0
    %122 = vmatpush1.bf16.msra.mxu0 0
    %123 = vmatprep.subr.bf16.mxu0 0
    %124 = vmatpush1.bf16.msra.mxu0 0
    %125 = vmatprep.subr.bf16.mxu0 0
    %126 = vmatpush1.bf16.msra.mxu0 0
    %127 = vmatprep.subr.bf16.mxu0 0
    %128 = vmatpush1.bf16.msra.mxu0 0
    %129 = vmatprep.subr.bf16.mxu0 0
    %130 = vmatpush1.bf16.msra.mxu0 0
    %131 = vmatprep.mubr.bf16.mxu0 0
    %132 = vmatmul.mubr.bf16.gmra.mrb[0].mxu0 %v97
    %v133 = vpop.f32.mrb[0].mxu0
    %v134 = vadd.f32 %v81, %v133
    %v135 = vpop.f32.mrb[0].mxu0
    %v136 = vpop.f32.mrb[0].mxu0
    %v137 = vpop.f32.mrb[0].mxu0
    %138 = vdwg.mxu0
    %v139 = vtanh.pop %v134
    %v140 = vpack.c.bf16 %v139, %v139
    %v141 = vld [vmem:[#allocation4] sm:$0xf]
    %v142 = vld [vmem:[#allocation4 + $0x4] sm:$0xf]
    %v143 = vld [vmem:[#allocation4 + $0x8] sm:$0xf]
    %v144 = vld [vmem:[#allocation4 + $0xc] sm:$0xf]
    %v145 = vld [vmem:[#allocation6] sm:$0x1]
    %v147 = vlaneseq
    %v148 = vshrl.u32 %v147, 7
    %v149 = vsub.s32 0, %v148
    %v150 = vrot.slane %v145, %v149
    %v156 = vunpack.c.l.b16 %v141
    %v157 = vunpack.c.l.b16 %v142
    %v158 = vunpack.c.l.b16 %v143
    %v159 = vunpack.c.l.b16 %v144
    %v160 = vpack.c.b16 %v157, %v156
    %v161 = vpack.c.b16 %v159, %v158
    %v165 = vsel %vm95, %v140, 0
    %167 = vmatprep.subr.bf16.mxu0 0
    %168 = vmatpush1.bf16.msra.mxu0 %v160
    %169 = vmatprep.subr.bf16.mxu0 0
    %170 = vmatpush1.bf16.msra.mxu0 %v161
    %171 = vmatprep.subr.bf16.mxu0 0
    %172 = vmatpush1.bf16.msra.mxu0 0
    %173 = vmatprep.subr.bf16.mxu0 0
    %174 = vmatpush1.bf16.msra.mxu0 0
    %175 = vmatprep.subr.bf16.mxu0 0
    %176 = vmatpush1.bf16.msra.mxu0 0
    %177 = vmatprep.subr.bf16.mxu0 0
    %178 = vmatpush1.bf16.msra.mxu0 0
    %179 = vmatprep.subr.bf16.mxu0 0
    %180 = vmatpush1.bf16.msra.mxu0 0
    %181 = vmatprep.subr.bf16.mxu0 0
    %182 = vmatpush1.bf16.msra.mxu0 0
    %183 = vmatprep.subr.bf16.mxu0 0
    %184 = vmatpush1.bf16.msra.mxu0 0
    %185 = vmatprep.subr.bf16.mxu0 0
    %186 = vmatpush1.bf16.msra.mxu0 0
    %187 = vmatprep.subr.bf16.mxu0 0
    %188 = vmatpush1.bf16.msra.mxu0 0
    %189 = vmatprep.subr.bf16.mxu0 0
    %190 = vmatpush1.bf16.msra.mxu0 0
    %191 = vmatprep.subr.bf16.mxu0 0
    %192 = vmatpush1.bf16.msra.mxu0 0
    %193 = vmatprep.subr.bf16.mxu0 0
    %194 = vmatpush1.bf16.msra.mxu0 0
    %195 = vmatprep.subr.bf16.mxu0 0
    %196 = vmatpush1.bf16.msra.mxu0 0
    %197 = vmatprep.subr.bf16.mxu0 0
    %198 = vmatpush1.bf16.msra.mxu0 0
    %199 = vmatprep.mubr.bf16.mxu0 0
    %200 = vmatmul.mubr.bf16.gmra.mrb[0].mxu0 %v165
    %v201 = vpop.f32.mrb[0].mxu0
    %v202 = vadd.f32 %v150, %v201
    %v203 = vpop.f32.mrb[0].mxu0
    %v204 = vpop.f32.mrb[0].mxu0
    %v205 = vpop.f32.mrb[0].mxu0
    %206 = vdwg.mxu0
    %v207 = vtanh.pop %v202
    %v208 = vpack.c.bf16 %v207, %v207
    %v209 = vld [vmem:[%s5] sm:$0xf]
    %v210 = vld [vmem:[%s5 + $0x4] sm:$0xf]
    %v211 = vld [vmem:[%s5 + $0x8] sm:$0xf]
    %v212 = vld [vmem:[%s5 + $0xc] sm:$0xf]
    %v213 = vld [vmem:[%s6] sm:$0x1]
    %v215 = vlaneseq
    %v216 = vshrl.u32 %v215, 7
    %v217 = vsub.s32 0, %v216
    %v218 = vrot.slane %v213, %v217
    %v224 = vunpack.c.l.b16 %v209
    %v225 = vunpack.c.l.b16 %v210
    %v226 = vunpack.c.l.b16 %v211
    %v227 = vunpack.c.l.b16 %v212
    %v228 = vpack.c.b16 %v225, %v224
    %v229 = vpack.c.b16 %v227, %v226
    %v233 = vsel %vm95, %v208, 0
    %235 = vmatprep.subr.bf16.mxu0 0
    %236 = vmatpush1.bf16.msra.mxu0 %v228
    %237 = vmatprep.subr.bf16.mxu0 0
    %238 = vmatpush1.bf16.msra.mxu0 %v229
    %239 = vmatprep.subr.bf16.mxu0 0
    %240 = vmatpush1.bf16.msra.mxu0 0
    %241 = vmatprep.subr.bf16.mxu0 0
    %242 = vmatpush1.bf16.msra.mxu0 0
    %243 = vmatprep.subr.bf16.mxu0 0
    %244 = vmatpush1.bf16.msra.mxu0 0
    %245 = vmatprep.subr.bf16.mxu0 0
    %246 = vmatpush1.bf16.msra.mxu0 0
    %247 = vmatprep.subr.bf16.mxu0 0
    %248 = vmatpush1.bf16.msra.mxu0 0
    %249 = vmatprep.subr.bf16.mxu0 0
    %250 = vmatpush1.bf16.msra.mxu0 0
    %251 = vmatprep.subr.bf16.mxu0 0
    %252 = vmatpush1.bf16.msra.mxu0 0
    %253 = vmatprep.subr.bf16.mxu0 0
    %254 = vmatpush1.bf16.msra.mxu0 0
    %255 = vmatprep.subr.bf16.mxu0 0
    %256 = vmatpush1.bf16.msra.mxu0 0
    %257 = vmatprep.subr.bf16.mxu0 0
    %258 = vmatpush1.bf16.msra.mxu0 0
    %259 = vmatprep.subr.bf16.mxu0 0
    %260 = vmatpush1.bf16.msra.mxu0 0
    %261 = vmatprep.subr.bf16.mxu0 0
    %262 = vmatpush1.bf16.msra.mxu0 0
    %263 = vmatprep.subr.bf16.mxu0 0
    %264 = vmatpush1.bf16.msra.mxu0 0
    %265 = vmatprep.subr.bf16.mxu0 0
    %266 = vmatpush1.bf16.msra.mxu0 0
    %267 = vmatprep.mubr.bf16.mxu0 0
    %268 = vmatmul.mubr.bf16.gmra.mrb[0].mxu0 %v233
    %v269 = vpop.f32.mrb[0].mxu0
    %v270 = vadd.f32 %v218, %v269
    %v271 = vpop.f32.mrb[0].mxu0
    %v272 = vpop.f32.mrb[0].mxu0
    %v273 = vpop.f32.mrb[0].mxu0
    %274 = vdwg.mxu0
    %v275 = vtanh.pop %v270
    %v276 = vpack.c.bf16 %v275, %v275
    %v277 = vld [vmem:[%s7] sm:$0xf]
    %v278 = vld [vmem:[%s7 + $0x4] sm:$0xf]
    %v279 = vld [vmem:[%s7 + $0x8] sm:$0xf]
    %v280 = vld [vmem:[%s7 + $0xc] sm:$0xf]
    %v281 = vld [vmem:[%s8] sm:$0x1]
    %v283 = vlaneseq
    %v284 = vshrl.u32 %v283, 7
    %v285 = vsub.s32 0, %v284
    %v286 = vrot.slane %v281, %v285
    %v292 = vunpack.c.l.b16 %v277
    %v293 = vunpack.c.l.b16 %v278
    %v294 = vunpack.c.l.b16 %v279
    %v295 = vunpack.c.l.b16 %v280
    %v296 = vpack.c.b16 %v293, %v292
    %v297 = vpack.c.b16 %v295, %v294
    %v301 = vsel %vm95, %v276, 0
    %303 = vmatprep.subr.bf16.mxu0 0
    %304 = vmatpush1.bf16.msra.mxu0 %v296
    %305 = vmatprep.subr.bf16.mxu0 0
    %306 = vmatpush1.bf16.msra.mxu0 %v297
    %307 = vmatprep.subr.bf16.mxu0 0
    %308 = vmatpush1.bf16.msra.mxu0 0
    %309 = vmatprep.subr.bf16.mxu0 0
    %310 = vmatpush1.bf16.msra.mxu0 0
    %311 = vmatprep.subr.bf16.mxu0 0
    %312 = vmatpush1.bf16.msra.mxu0 0
    %313 = vmatprep.subr.bf16.mxu0 0
    %314 = vmatpush1.bf16.msra.mxu0 0
    %315 = vmatprep.subr.bf16.mxu0 0
    %316 = vmatpush1.bf16.msra.mxu0 0
    %317 = vmatprep.subr.bf16.mxu0 0
    %318 = vmatpush1.bf16.msra.mxu0 0
    %319 = vmatprep.subr.bf16.mxu0 0
    %320 = vmatpush1.bf16.msra.mxu0 0
    %321 = vmatprep.subr.bf16.mxu0 0
    %322 = vmatpush1.bf16.msra.mxu0 0
    %323 = vmatprep.subr.bf16.mxu0 0
    %324 = vmatpush1.bf16.msra.mxu0 0
    %325 = vmatprep.subr.bf16.mxu0 0
    %326 = vmatpush1.bf16.msra.mxu0 0
    %327 = vmatprep.subr.bf16.mxu0 0
    %328 = vmatpush1.bf16.msra.mxu0 0
    %329 = vmatprep.subr.bf16.mxu0 0
    %330 = vmatpush1.bf16.msra.mxu0 0
    %331 = vmatprep.subr.bf16.mxu0 0
    %332 = vmatpush1.bf16.msra.mxu0 0
    %333 = vmatprep.subr.bf16.mxu0 0
    %334 = vmatpush1.bf16.msra.mxu0 0
    %335 = vmatprep.mubr.bf16.mxu0 0
    %336 = vmatmul.mubr.bf16.gmra.mrb[0].mxu0 %v301
    %v337 = vpop.f32.mrb[0].mxu0
    %v338 = vadd.f32 %v286, %v337
    %v339 = vpop.f32.mrb[0].mxu0
    %v340 = vpop.f32.mrb[0].mxu0
    %v341 = vpop.f32.mrb[0].mxu0
    %342 = vdwg.mxu0
    %v343 = vxor.u32 %v338, 2147483648
    %v344 = vmul.f32 %v343, 1.442695
    %v345 = vpow.pop %v344
    %v346 = vadd.f32 %v345, 1.0
    %v347 = vrcp.pop %v346
    %v348 = vmul.f32 1.0, %v347
    %350 = vrot.lane.b32.xlu0 %v348, 4
    %v351 = vpop.permute.xlu0 %350
    %vm353 = vcmask 31744
    %v354 = vsel %vm353, %v338, %v351
    %vm355 = vcmask 64512
    %356 = vst.msk [vmem:[%s9] sm:$0xff] %vm355, %v354
    // Predicated region
    $region50: #{neural_net_forward.1} parent=1 // pred_check
      _
    $region51: #{neural_net_forward.1} parent=1 // pred_check_branch
      %358 = sbr.rel (0) target = $region53
    $region52: #{neural_net_forward.1} parent=1 // pred_region
      _
    $region53: #{neural_net_forward.1} parent=1 // pred_fallthru
      _
    // Predicated region
    $region54: #{neural_net_forward.1} parent=1 // pred_check
      _
    $region55: #{neural_net_forward.1} parent=1 // pred_check_branch
      %360 = sbr.rel (0) target = $region57
    $region56: #{neural_net_forward.1} parent=1 // pred_region
      _
    $region57: #{neural_net_forward.1} parent=1 // pred_fallthru
      _
    %361 = vsyncpa [#allocation3], 1
    %362 = vsyncpa [#allocation5], 1

</llo_original>
